<compile_context>
chip_gen: v7x
topology: tpu7x:2x2x1
jax: 0.10.0
libtpu: 0.0.40
codegen_flags: <defaults>
</compile_context>

<pallas_src>
import jax
import jax.numpy as jnp
from jax.experimental import pallas as pl
from jax.experimental.pallas import tpu as pltpu


# ----------------------------------------------------------------------------
# Pallas kernel: rewrite the head slab rows [0, HS) of each class's prompt.
# ----------------------------------------------------------------------------
def _prompt_head_kernel(head_ref, tmpl_ref, out_ref):
    # head_ref : (H, D)      class-invariant [SOS | ctx]  (fetched once)
    # tmpl_ref : (T, HS, D)  head slab of the pre-placed prompt template
    # out_ref  : (T, HS, D)  head slab of the (aliased) output
    # Rows [HS, 77) of the output are never touched; they keep the suffixes
    # already sitting in the aliased template buffer.
    T, HS, D = out_ref.shape
    H = head_ref.shape[0]
    head_b = jnp.broadcast_to(head_ref[...][None, :, :], (T, H, D))
    if HS > H:
        # Re-emit the template's suffix rows [H, HS) so the store is a single
        # aligned, unmasked full-block write (no per-vreg vst.msk / rotates).
        out_ref[...] = jnp.concatenate([head_b, tmpl_ref[:, H:, :]], axis=1)
    else:
        out_ref[...] = head_b


# ----------------------------------------------------------------------------
# Generation-aware sizing helpers
# ----------------------------------------------------------------------------
def _tpu_vmem_and_cores():
    """Returns (per-core VMEM capacity bytes, TensorCores per device).

    Falls back to conservative defaults if the query is unavailable."""
    vmem = 64 * 1024 * 1024
    cores = 1
    queried = False
    try:
        info = pltpu.get_tpu_info()
        v = getattr(info, "vmem_capacity_bytes", None)
        if v:
            vmem = int(v)
            queried = True
        for attr in ("num_cores", "core_count", "num_tensorcores"):
            c = getattr(info, attr, None)
            if c:
                cores = int(c)
                break
    except Exception:
        pass
    if queried and cores == 1 and vmem <= 64 * 1024 * 1024:
        # 64 MiB-per-TC chips (v7x class) carry two TensorCores.
        cores = 2
    return vmem, cores


def _largest_divisor_leq(n, cap, prefer_even_quotient=False):
    """Largest divisor of n that is <= cap (optionally with an even quotient)."""
    cap = max(1, min(int(n), int(cap)))
    best, best_even = 1, None
    for d in range(1, cap + 1):
        if n % d == 0:
            best = d
            if (n // d) % 2 == 0:
                best_even = d
    if prefer_even_quotient and best_even is not None:
        return best_even
    return best


# ----------------------------------------------------------------------------
# Wrapper
# ----------------------------------------------------------------------------
def assemble_prompts(sos, ctx, prompt_template, *, tile_cls=None):
    """sos: (1, D), ctx: (n_ctx, D), prompt_template: (n_cls, seq, D) with the
    [SOS] prefix and per-class suffixes already placed at their final rows.
    Returns prompts (n_cls, seq, D) = [SOS | ctx | suffix] per class."""
    n_cls, seq, D = prompt_template.shape
    dtype = prompt_template.dtype
    n_ctx = ctx.shape[0]
    H = 1 + n_ctx
    assert H < seq, "context does not fit in the prompt"

    # Class-invariant head [SOS | ctx]; explicit cast to the prompt dtype
    # (ctx may be a higher-precision learnable parameter).
    head = jnp.concatenate(
        [sos.reshape(1, D).astype(dtype), ctx.astype(dtype)], axis=0)    # (H, D)

    itemsize = jnp.dtype(dtype).itemsize
    sublane = max(8, 8 * (4 // max(1, itemsize)))    # 8 f32 / 16 bf16 / 32 int8
    head_slab = min(seq, ((H + sublane - 1) // sublane) * sublane)

    vmem_cap, n_tc = _tpu_vmem_and_cores()
    # Leave headroom for Mosaic scratch/pipeline buffers: 48 MiB on 64 MiB-VMEM
    # chips (v7x), 96 MiB on 128 MiB chips (v5e/v6e).
    vmem_limit = int(min(max(32 * 1024 * 1024, (vmem_cap * 3) // 4),
                         100 * 1024 * 1024))

    if tile_cls is None:
        # Double-buffered working set: (template-slab in + out-slab) per class
        # tile, plus the tiny shared head.
        per_cls = 2 * head_slab * D * itemsize
        budget = vmem_limit // 2
        max_tile = max(1, (budget - H * D * itemsize) // (2 * per_cls))
        written_bytes = n_cls * head_slab * D * itemsize
        # Only split the grid when there are multiple TensorCores AND the
        # problem is big enough to amortize ~0.35 us per grid step.
        want_split = (n_tc >= 2 and n_cls >= 2
                      and written_bytes > 2 * 1024 * 1024)
        if want_split:
            max_tile = min(max_tile, max(1, n_cls // 2))
        tile_cls = _largest_divisor_leq(n_cls, max_tile,
                                        prefer_even_quotient=want_split)
    assert n_cls % tile_cls == 0, "tile_cls must divide n_cls (no pad/slice)"
    n_tiles = n_cls // tile_cls

    grid_spec = pltpu.PrefetchScalarGridSpec(
        num_scalar_prefetch=0,
        grid=(n_tiles,),
        in_specs=[
            # Shared head: constant index_map -> fetched once, reused.
            pl.BlockSpec((H, D), lambda i: (0, 0)),
            # Head slab of the template for this class tile.
            pl.BlockSpec((tile_cls, head_slab, D), lambda i: (i, 0, 0)),
        ],
        out_specs=pl.BlockSpec((tile_cls, head_slab, D), lambda i: (i, 0, 0)),
    )

    return pl.pallas_call(
        _prompt_head_kernel,
        out_shape=jax.ShapeDtypeStruct((n_cls, seq, D), dtype),
        grid_spec=grid_spec,
        # Output aliases the template buffer: rows [head_slab, seq) are never
        # written by the kernel and keep the pre-placed per-class suffixes.
        input_output_aliases={1: 0},
        compiler_params=pltpu.CompilerParams(
            dimension_semantics=("parallel",),
            vmem_limit_bytes=vmem_limit,
        ),
    )(head, prompt_template)


# ----------------------------------------------------------------------------
# JAX-side PromptLearner (synthetic, deterministic init — no checkpoint load)
# ----------------------------------------------------------------------------
class PromptLearner:
    # TODO(synk): the real module tokenizes text with CLIP's BPE tokenizer and
    # looks up clip_model.token_embedding; replaced here with a synthetic
    # embedding table + deterministic random token ids (not the hot path).
    def __init__(self, key, *, n_cls, n_ctx, dim, context_length=77,
                 vocab_size=512, dtype=jnp.float32):
        self.n_cls = n_cls
        self.n_ctx = n_ctx
        self.dim = dim
        self.context_length = context_length
        self.dtype = dtype

        k_emb, k_ctx_tok, k_cls_tok, k_cls_len = jax.random.split(key, 4)

        # Synthetic CLIP token_embedding table.
        token_embedding = jax.random.normal(
            k_emb, (vocab_size, dim), dtype=jnp.float32) * 0.02

        sos_id = 1
        eos_id = 2

        # ctx = token_embedding(init_ctx_tokens)  -> (n_ctx, dim), learnable.
        ctx_tokens = jax.random.randint(k_ctx_tok, (n_ctx,), 3, vocab_size)
        self.ctx = token_embedding[ctx_tokens].astype(dtype)

        # SOS embedding, stored once as (1, dim).  The PyTorch (n_cls, 1, dim)
        # buffer is just a broadcast of this row (kept for the reference).
        self.sos = token_embedding[jnp.array([sos_id])].astype(dtype)   # (1, dim)
        self.prefixs = jnp.broadcast_to(
            self.sos[None], (n_cls, 1, dim)).astype(dtype)

        # suffixs (mimics batch_construct_suffix): class tokens + EOS + 0-pad.
        target_length = context_length - 1 - n_ctx
        max_cls_length = target_length - 1
        cls_lens = jax.random.randint(k_cls_len, (n_cls,), 1, max_cls_length + 1)
        cls_tok = jax.random.randint(k_cls_tok, (n_cls, max_cls_length), 3, vocab_size)

        pos = jnp.arange(target_length)[None, :]                        # (1, L)
        lens = cls_lens[:, None]                                        # (n_cls, 1)
        tok = jnp.where(pos < lens, jnp.pad(cls_tok, ((0, 0), (0, 1))), 0)
        tok = jnp.where(pos == lens, eos_id, tok)                       # (n_cls, L)
        self.suffixs = token_embedding[tok].astype(dtype)               # (n_cls, L, dim)
        self.eos_indices = 1 + n_ctx + cls_lens                         # (n_cls,)

        # Pre-placed prompt template in the final (n_cls, 77, dim) layout:
        # row 0 = [SOS], rows [1+n_ctx, 77) = suffixes, ctx rows left zero
        # (the forward kernel rewrites rows [0, 1+n_ctx) every call).
        template = jnp.zeros((n_cls, context_length, dim), dtype=dtype)
        template = template.at[:, 0, :].set(self.sos[0])
        template = template.at[:, 1 + n_ctx:, :].set(self.suffixs)
        self.prompt_template = template

    def forward(self):
        return assemble_prompts(self.sos, self.ctx, self.prompt_template)


if __name__ == "__main__":
    key = jax.random.PRNGKey(0)

    # Small, TPU-friendly shapes implied by the module:
    #   n_cls=4 classes, n_ctx=4 ("a photo of a"), dim=128, context_length=77.
    learner = PromptLearner(key, n_cls=4, n_ctx=4, dim=128, context_length=77)

    prompts = learner.forward()
    prompts = jax.block_until_ready(prompts)

    # Reference (plain JAX) check of forward semantics.
    ref = jnp.concatenate(
        [learner.prefixs,
         jnp.broadcast_to(learner.ctx[None], (learner.n_cls,) + learner.ctx.shape),
         learner.suffixs],
        axis=1,
    )
    assert prompts.shape == (learner.n_cls, learner.context_length, learner.dim), prompts.shape
    assert prompts.dtype == learner.prefixs.dtype
    assert jnp.allclose(prompts, ref), "Pallas prompt assembly mismatch vs reference"

    print("KERNEL_OK")
</pallas_src>

<mosaic_0001>
module attributes {stable_mosaic.version = 11 : i64} {
  func.func @_prompt_head_kernel(%arg0: i32, %arg1: memref<5x128xf32, #tpu.memory_space<vmem>>, %arg2: memref<4x8x128xf32, #tpu.memory_space<vmem>>, %arg3: memref<4x8x128xf32, #tpu.memory_space<vmem>>) attributes {dimension_semantics = [#tpu.dimension_semantics<parallel>], iteration_bounds = array<i64: 1>, scalar_prefetch = 0 : i64, scratch_operands = 0 : i64, tpu.core_type = #tpu.core_type<tc>, window_params = [{pipeline_mode = #tpu.pipeline_mode<synchronous>, transform_indices = @transform_0, window_bounds = array<i64: 5, 128>}, {transform_indices = @transform_1, window_bounds = array<i64: 4, 8, 128>}, {transform_indices = @transform_2, window_bounds = array<i64: 4, 8, 128>}]} {
    %c0 = arith.constant 0 : index
    %c0_0 = arith.constant 0 : index
    %0 = vector.load %arg1[%c0, %c0_0] : memref<5x128xf32, #tpu.memory_space<vmem>>, vector<5x128xf32>
    %1 = vector.shape_cast %0 : vector<5x128xf32> to vector<1x5x128xf32>
    %2 = vector.shape_cast %1 : vector<1x5x128xf32> to vector<1x5x128xf32>
    %3 = vector.broadcast %2 : vector<1x5x128xf32> to vector<4x5x128xf32>
    %c0_1 = arith.constant 0 : index
    %c5 = arith.constant 5 : index
    %c0_2 = arith.constant 0 : index
    %4 = vector.load %arg2[%c0_1, %c5, %c0_2] : memref<4x8x128xf32, #tpu.memory_space<vmem>>, vector<4x3x128xf32>
    %5 = tpu.concatenate %3, %4 in 1 : vector<4x5x128xf32>, vector<4x3x128xf32> -> vector<4x8x128xf32>
    %c0_3 = arith.constant 0 : index
    %c0_4 = arith.constant 0 : index
    %c0_5 = arith.constant 0 : index
    %6 = vector.load %arg3[%c0_3, %c0_4, %c0_5] : memref<4x8x128xf32, #tpu.memory_space<vmem>>, vector<4x8x128xf32>
    tpu.vector_store %arg3[%c0_3, %c0_4, %c0_5], %5 {strides = array<i32>} : memref<4x8x128xf32, #tpu.memory_space<vmem>>, vector<4x8x128xf32>,
    return
  }
  func.func @transform_0(%arg0: i32) -> (i32, i32) {
    %c0_i32 = arith.constant 0 : i32
    %c0_i32_0 = arith.constant 0 : i32
    %c0_i32_1 = arith.constant 0 : i32
    return %c0_i32, %c0_i32_0 : i32, i32
  }
  func.func @transform_1(%arg0: i32) -> (i32, i32, i32) {
    %c0_i32 = arith.constant 0 : i32
    %c0_i32_0 = arith.constant 0 : i32
    %c0_i32_1 = arith.constant 0 : i32
    return %arg0, %c0_i32, %c0_i32_0 : i32, i32, i32
  }
  func.func @transform_2(%arg0: i32) -> (i32, i32, i32) {
    %c0_i32 = arith.constant 0 : i32
    %c0_i32_0 = arith.constant 0 : i32
    %c0_i32_1 = arith.constant 0 : i32
    return %arg0, %c0_i32, %c0_i32_0 : i32, i32, i32
  }
}

</mosaic_0001>

<llo_original>
// kernel: tpu_custom_call.1
$region0: #{tpu_custom_call.1}
  #allocation0 [shape = 'u32[]', space=smem, size = 0x4, offset = 0x4, fixed_abs, tag = 'smem constant byte address 0x4 - core index']
  #allocation1 [shape = 'u32[144,128]{1,0:T(1,128)}', space=vmem, size = 0x12000, scoped, tag = 'internal scratch']
  %s0 = inlined_call_operand.vmem [shape: f32[5,128], index: 0, kind: input, shape index: {}]
  %s1 = inlined_call_operand.vmem [shape: f32[4,77,128], index: 1, kind: input, shape index: {}, may-alias: {1,2}]
  %s2 = inlined_call_operand.vmem [shape: f32[4,77,128], index: 2, kind: output, shape index: {}, may-alias: {1,2}]
  %s3 = sld [smem:[#allocation0]]
  $region90: #{tpu_custom_call.1} parent=0
    _
  %s5 = ssub.s32 1, %s3
  %s6 = scalar_select 0, %s5, %s3
  $region1: #{tpu_custom_call.1} parent=0
    #allocation2 [shape = 'u8[16384]{0}', space=vmem, size = 0x4000, scoped, tag = 'input window, operand 1, single buffered']
    #allocation3 [shape = 'u8[16384]{0}', space=vmem, size = 0x4000, scoped, tag = 'output window, operand 0, single buffered']
    // Predicated region
    $region2: #{tpu_custom_call.1} parent=1 // pred_check
      _
    $region3: #{tpu_custom_call.1} parent=1 // pred_check_branch
      %8 = sbr.rel (0) target = $region5
    $region4: #{tpu_custom_call.1} parent=1 // pred_region
      _
    $region5: #{tpu_custom_call.1} parent=1 // pred_fallthru
      _
    // Predicated region
    $region6: #{tpu_custom_call.1} parent=1 // pred_check
      _
    $region7: #{tpu_custom_call.1} parent=1 // pred_check_branch
      %10 = sbr.rel (0) target = $region9
    $region8: #{tpu_custom_call.1} parent=1 // pred_region
      // Predicated region
      $region10: #{tpu_custom_call.1} parent=8 // pred_check
        _
      $region11: #{tpu_custom_call.1} parent=8 // pred_check_branch
        %12 = sbr.rel (0) target = $region13
      $region12: #{tpu_custom_call.1} parent=8 // pred_region
        // Predicated region
        $region14: #{tpu_custom_call.1} parent=12 // pred_check
          _
        $region15: #{tpu_custom_call.1} parent=12 // pred_check_branch
          %14 = sbr.rel (0) target = $region17
        $region16: #{tpu_custom_call.1} parent=12 // pred_region
          // Predicated region
          $region29: #{tpu_custom_call.1} parent=16 // pred_check
            _
          $region30: #{tpu_custom_call.1} parent=16 // pred_check_branch
            %35 = sbr.rel (0) target = $region32
          $region31: #{tpu_custom_call.1} parent=16 // pred_region
            loop: start=0, step=1, limit=1
            $region33: #{tpu_custom_call.1} parent=31 // loop_pre_header
              _
            $region34: #{tpu_custom_call.1} parent=31 // loop_header
              %s37 = sphi 0, %s41
              %p38 = scmp.ge.s32.totalorder %s37, 1
              %s42 = sphi %s1, %s1
              %s43 = sphi [#allocation2], [#allocation2]
            $region35: #{tpu_custom_call.1} parent=31 // loop_header_branch
              %40 = sbr.rel (%p38) target = $region39
            $region36: #{tpu_custom_call.1} parent=31 // loop_body
              %v44 = vld [vmem:[%s42] sm:$0xff]
              %45 = vst [vmem:[%s43] sm:$0xff] %v44
              %v46 = vld [vmem:[%s42 + $0x50] sm:$0xff]
              %47 = vst [vmem:[%s43 + $0x8] sm:$0xff] %v46
              %v48 = vld [vmem:[%s42 + $0xa0] sm:$0xff]
              %49 = vst [vmem:[%s43 + $0x10] sm:$0xff] %v48
              %v50 = vld [vmem:[%s42 + $0xf0] sm:$0xff]
              %51 = vst [vmem:[%s43 + $0x18] sm:$0xff] %v50
            $region37: #{tpu_custom_call.1} parent=31 // loop_footer
              %s41 = sadd.s32 1, %s37
            $region38: #{tpu_custom_call.1} parent=31 // loop_footer_branch
              %36 = sbr.rel target = $region34
            $region39: #{tpu_custom_call.1} parent=31 // loop_exit
              _
          $region32: #{tpu_custom_call.1} parent=16 // pred_fallthru
            _
          // Predicated region
          $region40: #{tpu_custom_call.1} parent=16 // pred_check
            _
          $region41: #{tpu_custom_call.1} parent=16 // pred_check_branch
            %53 = sbr.rel target = $region43
          $region42: #{tpu_custom_call.1} parent=16 // pred_region
            _
          $region43: #{tpu_custom_call.1} parent=16 // pred_fallthru
            _
        $region17: #{tpu_custom_call.1} parent=12 // pred_fallthru
          _
        // Predicated region
        $region18: #{tpu_custom_call.1} parent=12 // pred_check
          _
        $region19: #{tpu_custom_call.1} parent=12 // pred_check_branch
          %16 = sbr.rel target = $region21
        $region20: #{tpu_custom_call.1} parent=12 // pred_region
          loop: start=0, step=1, limit=1
          $region22: #{tpu_custom_call.1} parent=20 // loop_pre_header
            _
          $region23: #{tpu_custom_call.1} parent=20 // loop_header
            %s19 = sphi 0, %s23
            %p20 = scmp.ge.s32.totalorder %s19, 1
            %s24 = sphi %s1, %s1
            %s25 = sphi [#allocation2], [#allocation2]
          $region24: #{tpu_custom_call.1} parent=20 // loop_header_branch
            %22 = sbr.rel (%p20) target = $region28
          $region25: #{tpu_custom_call.1} parent=20 // loop_body
            %v26 = vld [vmem:[%s24] sm:$0xff]
            %27 = vst [vmem:[%s25] sm:$0xff] %v26
            %v28 = vld [vmem:[%s24 + $0x50] sm:$0xff]
            %29 = vst [vmem:[%s25 + $0x8] sm:$0xff] %v28
            %v30 = vld [vmem:[%s24 + $0xa0] sm:$0xff]
            %31 = vst [vmem:[%s25 + $0x10] sm:$0xff] %v30
            %v32 = vld [vmem:[%s24 + $0xf0] sm:$0xff]
            %33 = vst [vmem:[%s25 + $0x18] sm:$0xff] %v32
          $region26: #{tpu_custom_call.1} parent=20 // loop_footer
            %s23 = sadd.s32 1, %s19
          $region27: #{tpu_custom_call.1} parent=20 // loop_footer_branch
            %18 = sbr.rel target = $region23
          $region28: #{tpu_custom_call.1} parent=20 // loop_exit
            _
        $region21: #{tpu_custom_call.1} parent=12 // pred_fallthru
          _
      $region13: #{tpu_custom_call.1} parent=8 // pred_fallthru
        _
      %54 = vnop
    $region9: #{tpu_custom_call.1} parent=1 // pred_fallthru
      _
    // Predicated region
    $region44: #{tpu_custom_call.1} parent=1 // pred_check
      _
    $region45: #{tpu_custom_call.1} parent=1 // pred_check_branch
      %56 = sbr.rel (0) target = $region47
    $region46: #{tpu_custom_call.1} parent=1 // pred_region
      _
    $region47: #{tpu_custom_call.1} parent=1 // pred_fallthru
      _
    %v57 = vld [vmem:[%s0] sm:$0x1f]
    %v58 = vld [vmem:[#allocation2 + $0x5] sm:$0x7]
    %v59 = vld [vmem:[#allocation2 + $0xd] sm:$0x7]
    %v60 = vld [vmem:[#allocation2 + $0x15] sm:$0x7]
    %v61 = vld [vmem:[#allocation2 + $0x1d] sm:$0x7]
    %v66 = vrot.slane %v58, 3
    %v67 = vrot.slane %v59, 3
    %v68 = vrot.slane %v60, 3
    %v69 = vrot.slane %v61, 3
    %vm74 = vcmask 1044480
    %v75 = vsel %vm74, %v57, %v66
    %v76 = vsel %vm74, %v57, %v67
    %v77 = vsel %vm74, %v57, %v68
    %v78 = vsel %vm74, %v57, %v69
    %79 = vst [vmem:[#allocation3] sm:$0xff] %v75
    %80 = vst [vmem:[#allocation3 + $0x8] sm:$0xff] %v76
    %81 = vst [vmem:[#allocation3 + $0x10] sm:$0xff] %v77
    %82 = vst [vmem:[#allocation3 + $0x18] sm:$0xff] %v78
    // Predicated region
    $region48: #{tpu_custom_call.1} parent=1 // pred_check
      _
    $region49: #{tpu_custom_call.1} parent=1 // pred_check_branch
      %84 = sbr.rel (0) target = $region51
    $region50: #{tpu_custom_call.1} parent=1 // pred_region
      // Predicated region
      $region52: #{tpu_custom_call.1} parent=50 // pred_check
        _
      $region53: #{tpu_custom_call.1} parent=50 // pred_check_branch
        %86 = sbr.rel (0) target = $region55
      $region54: #{tpu_custom_call.1} parent=50 // pred_region
        // Predicated region
        $region56: #{tpu_custom_call.1} parent=54 // pred_check
          _
        $region57: #{tpu_custom_call.1} parent=54 // pred_check_branch
          %88 = sbr.rel (0) target = $region59
        $region58: #{tpu_custom_call.1} parent=54 // pred_region
          // Predicated region
          $region71: #{tpu_custom_call.1} parent=58 // pred_check
            _
          $region72: #{tpu_custom_call.1} parent=58 // pred_check_branch
            %109 = sbr.rel (0) target = $region74
          $region73: #{tpu_custom_call.1} parent=58 // pred_region
            loop: start=0, step=1, limit=1
            $region75: #{tpu_custom_call.1} parent=73 // loop_pre_header
              _
            $region76: #{tpu_custom_call.1} parent=73 // loop_header
              %s111 = sphi 0, %s115
              %p112 = scmp.ge.s32.totalorder %s111, 1
              %s116 = sphi [#allocation3], [#allocation3]
              %s117 = sphi %s2, %s2
            $region77: #{tpu_custom_call.1} parent=73 // loop_header_branch
              %114 = sbr.rel (%p112) target = $region81
            $region78: #{tpu_custom_call.1} parent=73 // loop_body
              %v118 = vld [vmem:[%s116] sm:$0xff]
              %119 = vst [vmem:[%s117] sm:$0xff] %v118
              %v120 = vld [vmem:[%s116 + $0x8] sm:$0xff]
              %121 = vst [vmem:[%s117 + $0x50] sm:$0xff] %v120
              %v122 = vld [vmem:[%s116 + $0x10] sm:$0xff]
              %123 = vst [vmem:[%s117 + $0xa0] sm:$0xff] %v122
              %v124 = vld [vmem:[%s116 + $0x18] sm:$0xff]
              %125 = vst [vmem:[%s117 + $0xf0] sm:$0xff] %v124
            $region79: #{tpu_custom_call.1} parent=73 // loop_footer
              %s115 = sadd.s32 1, %s111
            $region80: #{tpu_custom_call.1} parent=73 // loop_footer_branch
              %110 = sbr.rel target = $region76
            $region81: #{tpu_custom_call.1} parent=73 // loop_exit
              _
          $region74: #{tpu_custom_call.1} parent=58 // pred_fallthru
            _
          // Predicated region
          $region82: #{tpu_custom_call.1} parent=58 // pred_check
            _
          $region83: #{tpu_custom_call.1} parent=58 // pred_check_branch
            %127 = sbr.rel target = $region85
          $region84: #{tpu_custom_call.1} parent=58 // pred_region
            _
          $region85: #{tpu_custom_call.1} parent=58 // pred_fallthru
            _
        $region59: #{tpu_custom_call.1} parent=54 // pred_fallthru
          _
        // Predicated region
        $region60: #{tpu_custom_call.1} parent=54 // pred_check
          _
        $region61: #{tpu_custom_call.1} parent=54 // pred_check_branch
          %90 = sbr.rel target = $region63
        $region62: #{tpu_custom_call.1} parent=54 // pred_region
          loop: start=0, step=1, limit=1
          $region64: #{tpu_custom_call.1} parent=62 // loop_pre_header
            _
          $region65: #{tpu_custom_call.1} parent=62 // loop_header
            %s93 = sphi 0, %s97
            %p94 = scmp.ge.s32.totalorder %s93, 1
            %s98 = sphi [#allocation3], [#allocation3]
            %s99 = sphi %s2, %s2
          $region66: #{tpu_custom_call.1} parent=62 // loop_header_branch
            %96 = sbr.rel (%p94) target = $region70
          $region67: #{tpu_custom_call.1} parent=62 // loop_body
            %v100 = vld [vmem:[%s98] sm:$0xff]
            %101 = vst [vmem:[%s99] sm:$0xff] %v100
            %v102 = vld [vmem:[%s98 + $0x8] sm:$0xff]
            %103 = vst [vmem:[%s99 + $0x50] sm:$0xff] %v102
            %v104 = vld [vmem:[%s98 + $0x10] sm:$0xff]
            %105 = vst [vmem:[%s99 + $0xa0] sm:$0xff] %v104
            %v106 = vld [vmem:[%s98 + $0x18] sm:$0xff]
            %107 = vst [vmem:[%s99 + $0xf0] sm:$0xff] %v106
          $region68: #{tpu_custom_call.1} parent=62 // loop_footer
            %s97 = sadd.s32 1, %s93
          $region69: #{tpu_custom_call.1} parent=62 // loop_footer_branch
            %92 = sbr.rel target = $region65
          $region70: #{tpu_custom_call.1} parent=62 // loop_exit
            _
        $region63: #{tpu_custom_call.1} parent=54 // pred_fallthru
          _
      $region55: #{tpu_custom_call.1} parent=50 // pred_fallthru
        _
      %128 = vnop
    $region51: #{tpu_custom_call.1} parent=1 // pred_fallthru
      _
    // Predicated region
    $region86: #{tpu_custom_call.1} parent=1 // pred_check
      _
    $region87: #{tpu_custom_call.1} parent=1 // pred_check_branch
      %130 = sbr.rel (0) target = $region89
    $region88: #{tpu_custom_call.1} parent=1 // pred_region
      _
    $region89: #{tpu_custom_call.1} parent=1 // pred_fallthru
      _

</llo_original>
